<compile_context>
chip_gen: v5e
topology: v5e:2x2
jax: 0.10.0
libtpu: 0.0.40
codegen_flags: <defaults>
</compile_context>

<pallas_src>
import jax
import jax.numpy as jnp
from jax import lax
from jax.experimental import pallas as pl
from jax.experimental.pallas import tpu as pltpu


def _affine_homography_kernel(scale_ref, model_ref, o_ref):
    """o = homography( diag(sx,sy) @ model + eye(3)[:2] ).

    scale_ref : (2,)  f32 SMEM   -> [sx, sy] (diagonal of the module's scale)
    model_ref : (2,3) f32 VMEM
    o_ref     : (3,3) f32 VMEM   (leading size-1 dim of the (1,3,3) output is
                                  squeezed by the BlockSpec)
    """
    sx = scale_ref[0]
    sy = scale_ref[1]
    m = model_ref[...]                                         # (2, 3)

    # eye(3)[:2] and per-row scale splats built from iota (no captured consts).
    row = lax.broadcasted_iota(jnp.int32, (2, 3), 0)
    col = lax.broadcasted_iota(jnp.int32, (2, 3), 1)
    eye23 = (row == col).astype(jnp.float32)                   # offset buffer
    s_rows = jnp.where(row == 0, sx, sy)                       # [[sx]*3,[sy]*3]

    # diag(sx, sy) @ m + offset  ==  s_rows * m + eye23   (pure VPU)
    affine = s_rows * m + eye23                                # (2, 3)

    # Direct row stores (no sublane-axis concatenate).
    o_ref[0:2, :] = affine
    lane = lax.broadcasted_iota(jnp.int32, (1, 3), 1)
    o_ref[2:3, :] = (lane == 2).astype(jnp.float32)            # [0, 0, 1]


def affine_model_forward(model, sx=1.0, sy=1.0):
    """Pallas-backed equivalent of AffineModel.forward().

    model : (2, 3) f32 learnable parameter
    sx, sy: diagonal entries of the module's `scale` buffer [[sx,0],[0,sy]]
    returns (1, 3, 3) f32 homography
    """
    scale_vec = jnp.asarray([sx, sy], dtype=jnp.float32)       # -> SMEM scalars
    return pl.pallas_call(
        _affine_homography_kernel,
        out_shape=jax.ShapeDtypeStruct((1, 3, 3), jnp.float32),
        # NOTE: block_shape == full array shape is the documented exception to
        # the (8,128) tile minimum; do not add a grid or shrink these blocks.
        in_specs=[
            pl.BlockSpec(memory_space=pltpu.MemorySpace.SMEM),  # [sx, sy]
            pl.BlockSpec((2, 3), lambda: (0, 0)),               # model
        ],
        out_specs=pl.BlockSpec((None, 3, 3), lambda: (0, 0, 0)),
    )(scale_vec, model.astype(jnp.float32))


def _reference_forward(model, sx, sy):
    scale = jnp.array([[sx, 0.0], [0.0, sy]], dtype=jnp.float32)
    offset = jnp.eye(3, dtype=jnp.float32)[:2]
    affine = scale @ model.astype(jnp.float32) + offset
    bottom = jnp.array([[0.0, 0.0, 1.0]], dtype=jnp.float32)
    return jnp.concatenate([affine, bottom], axis=0)[None]


# TODO(synk): forward_inverse (torch.inverse of the composed 3x3) is not
# implemented as a kernel; use jnp.linalg.inv on the (1,3,3) result if needed.

if __name__ == "__main__":
    key = jax.random.PRNGKey(0)
    # Module initializes `model` to zeros; use small random values so the
    # compute path is actually exercised. Non-trivial sx/sy likewise.
    model = jax.random.normal(key, (2, 3), dtype=jnp.float32) * 0.1
    sx, sy = 1.5, 0.5

    out = affine_model_forward(model, sx=sx, sy=sy)
    out = jax.block_until_ready(out)

    ref = _reference_forward(model, sx, sy)
    assert out.shape == (1, 3, 3), out.shape
    assert out.dtype == jnp.float32, out.dtype
    assert jnp.allclose(out, ref, atol=1e-6), (out, ref)

    print("KERNEL_OK")
</pallas_src>

<mosaic_0001>
module attributes {stable_mosaic.version = 11 : i64} {
  func.func @_affine_homography_kernel(%arg0: memref<2xf32, #tpu.memory_space<smem>>, %arg1: memref<2x3xf32, #tpu.memory_space<vmem>>, %arg2: memref<1x3x3xf32, #tpu.memory_space<vmem>>) attributes {dimension_semantics = [], scalar_prefetch = 0 : i64, scratch_operands = 0 : i64, tpu.core_type = #tpu.core_type<tc>} {
    %c0 = arith.constant 0 : index
    %0 = memref.load %arg0[%c0] : memref<2xf32, #tpu.memory_space<smem>>
    %c1 = arith.constant 1 : index
    %1 = memref.load %arg0[%c1] : memref<2xf32, #tpu.memory_space<smem>>
    %c0_0 = arith.constant 0 : index
    %c0_1 = arith.constant 0 : index
    %2 = vector.load %arg1[%c0_0, %c0_1] : memref<2x3xf32, #tpu.memory_space<vmem>>, vector<2x3xf32>
    %3 = tpu.iota {dimensions = array<i32: 0>} : vector<2x3xi32>
    %4 = tpu.iota {dimensions = array<i32: 1>} : vector<2x3xi32>
    %5 = arith.cmpi eq, %3, %4 : vector<2x3xi32>
    %6 = arith.extui %5 : vector<2x3xi1> to vector<2x3xi32>
    %7 = arith.sitofp %6 : vector<2x3xi32> to vector<2x3xf32>
    %c0_i32 = arith.constant 0 : i32
    %8 = vector.broadcast %c0_i32 : i32 to vector<2x3xi32>
    %9 = arith.cmpi eq, %3, %8 : vector<2x3xi32>
    %10 = vector.broadcast %0 : f32 to vector<2x3xf32>
    %11 = vector.broadcast %1 : f32 to vector<2x3xf32>
    %12 = arith.select %9, %10, %11 : vector<2x3xi1>, vector<2x3xf32>
    %13 = arith.mulf %12, %2 : vector<2x3xf32>
    %14 = arith.addf %13, %7 : vector<2x3xf32>
    %c0_2 = arith.constant 0 : index
    %c0_3 = arith.constant 0 : index
    %c0_4 = arith.constant 0 : index
    %15 = vector.load %arg2[%c0_2, %c0_3, %c0_4] : memref<1x3x3xf32, #tpu.memory_space<vmem>>, vector<1x2x3xf32>
    %16 = vector.shape_cast %15 : vector<1x2x3xf32> to vector<2x3xf32>
    %17 = vector.shape_cast %14 : vector<2x3xf32> to vector<1x2x3xf32>
    tpu.vector_store %arg2[%c0_2, %c0_3, %c0_4], %17 {strides = array<i32>} : memref<1x3x3xf32, #tpu.memory_space<vmem>>, vector<1x2x3xf32>,
    %18 = tpu.iota {dimensions = array<i32: 1>} : vector<1x3xi32>
    %c2_i32 = arith.constant 2 : i32
    %19 = vector.broadcast %c2_i32 : i32 to vector<1x3xi32>
    %20 = arith.cmpi eq, %18, %19 : vector<1x3xi32>
    %21 = arith.extui %20 : vector<1x3xi1> to vector<1x3xi32>
    %22 = arith.sitofp %21 : vector<1x3xi32> to vector<1x3xf32>
    %c0_5 = arith.constant 0 : index
    %c2 = arith.constant 2 : index
    %c0_6 = arith.constant 0 : index
    %23 = vector.load %arg2[%c0_5, %c2, %c0_6] : memref<1x3x3xf32, #tpu.memory_space<vmem>>, vector<1x1x3xf32>
    %24 = vector.shape_cast %23 : vector<1x1x3xf32> to vector<1x3xf32>
    %25 = vector.shape_cast %22 : vector<1x3xf32> to vector<1x1x3xf32>
    tpu.vector_store %arg2[%c0_5, %c2, %c0_6], %25 {strides = array<i32>} : memref<1x3x3xf32, #tpu.memory_space<vmem>>, vector<1x1x3xf32>,
    return
  }
}

</mosaic_0001>

<llo_original>
// kernel: tpu_custom_call.1
$region0: #{tpu_custom_call.1}
  #allocation0 [shape = 'u32[]', space=smem, size = 0x4, offset = 0x4, fixed_abs, tag = 'smem constant byte address 0x4 - core index']
  #allocation1 [shape = 'u32[72,128]{1,0:T(1,128)}', space=vmem, size = 0x9000, scoped, tag = 'internal scratch']
  %s0 = inlined_call_operand.hbm [shape: f32[2], index: 0, kind: input, shape index: {}]
  %s1 = inlined_call_operand.hbm [shape: f32[2,3], index: 1, kind: input, shape index: {}]
  %s2 = inlined_call_operand.vmem [shape: f32[1,3,3], index: 2, kind: output, shape index: {}]
  %s3 = sld [smem:[#allocation0]]
  $region26: #{tpu_custom_call.1} parent=0
    _
  %s5 = ssub.s32 1, %s3
  %s6 = scalar_select 0, %s5, %s3
  $region1: #{tpu_custom_call.1} parent=0
    #allocation2 [shape = 'u8[512]{0}', space=smem, size = 0x200, scoped, tag = 'input window, operand 0, single buffered']
    #allocation3 [shape = 's32[1]{0}', space=sflag, size = 0x4, scoped, tag = 'scoped memory for tpu_custom_call.1']
    #allocation4 [shape = 's32[1]{0}', space=sflag, size = 0x4, scoped, tag = 'scoped memory for tpu_custom_call.1']
    #allocation5 [shape = 'u8[1024]{0}', space=vmem, size = 0x400, scoped, tag = 'input window, operand 1, single buffered']
    %7 = vsyncpa [#allocation4], 0
    %8 = vsyncpa [#allocation3], 0
    // Predicated region
    $region2: #{tpu_custom_call.1} parent=1 // pred_check
      _
    $region3: #{tpu_custom_call.1} parent=1 // pred_check_branch
      %10 = sbr.rel (0) target = $region5
    $region4: #{tpu_custom_call.1} parent=1 // pred_region
      %12 = vsyncadd [#allocation4], 0
      %s14 = sshll.u32 %s0, 4
      %s15 = int_to_ptr.hbm [resolvable:$true] %s14
      %17 = dma.hbm_to_smem %s15, 16, [#allocation2], [#allocation4]
    $region5: #{tpu_custom_call.1} parent=1 // pred_fallthru
      _
    // Predicated region
    $region6: #{tpu_custom_call.1} parent=1 // pred_check
      _
    $region7: #{tpu_custom_call.1} parent=1 // pred_check_branch
      %19 = sbr.rel (0) target = $region9
    $region8: #{tpu_custom_call.1} parent=1 // pred_region
      %21 = vsyncadd [#allocation3], 0
      %s23 = sshll.u32 %s1, 4
      %s24 = int_to_ptr.hbm [resolvable:$true] %s23
      %s25 = sshll.u32 [#allocation5], 4
      %s26 = int_to_ptr.vmem [resolvable:$true] %s25
      %28 = dma.hbm_to_vmem [thread:$0]  %s24, 32, %s26, [#allocation3]
    $region9: #{tpu_custom_call.1} parent=1 // pred_fallthru
      _
    // Predicated region
    $region10: #{tpu_custom_call.1} parent=1 // pred_check
      _
    $region11: #{tpu_custom_call.1} parent=1 // pred_check_branch
      %30 = sbr.rel (0) target = $region13
    $region12: #{tpu_custom_call.1} parent=1 // pred_region
      %32 = dma.done [#allocation4], 16
    $region13: #{tpu_custom_call.1} parent=1 // pred_fallthru
      _
    // Predicated region
    $region14: #{tpu_custom_call.1} parent=1 // pred_check
      _
    $region15: #{tpu_custom_call.1} parent=1 // pred_check_branch
      %34 = sbr.rel (0) target = $region17
    $region16: #{tpu_custom_call.1} parent=1 // pred_region
      %36 = dma.done [#allocation3], 32
    $region17: #{tpu_custom_call.1} parent=1 // pred_fallthru
      _
    %37 = sfence
    %s38 = sld [smem:[#allocation2]]
    %s39 = sld [smem:[#allocation2 + $0x1]]
    %v40 = vld [vmem:[#allocation5] sm:$0x3]
    %v41 = vlaneseq
    %v42 = vshrl.u32 %v41, 7
    %v43 = vlaneseq
    %v44 = vand.u32 %v43, 127
    %vm45 = vcmp.eq.s32.totalorder %v42, %v44
    %v46 = vsel %vm45, 1, 0
    %v47 = vcvt.s32.f32 %v46
    %vm48 = vcmp.eq.s32.totalorder %v42, 0
    %v49 = vstv %s38
    %v50 = vstv %s39
    %v51 = vsel %vm48, %v49, %v50
    %v52 = vmul.f32 %v51, %v40
    %v53 = vadd.f32 %v52, %v47
    %vm54 = vcmask 17408
    %55 = vst.msk [vmem:[%s2] sm:$0x3] %vm54, %v53
    %vm56 = vcmp.eq.s32.totalorder %v44, 2
    %v57 = vsel %vm56, 1, 0
    %v58 = vcvt.s32.f32 %v57
    %vm59 = vcmask 16384
    %60 = vst.msk [vmem:[%s2 + $0x2] sm:$0x1] %vm59, %v58
    // Predicated region
    $region18: #{tpu_custom_call.1} parent=1 // pred_check
      _
    $region19: #{tpu_custom_call.1} parent=1 // pred_check_branch
      %62 = sbr.rel (0) target = $region21
    $region20: #{tpu_custom_call.1} parent=1 // pred_region
      _
    $region21: #{tpu_custom_call.1} parent=1 // pred_fallthru
      _
    // Predicated region
    $region22: #{tpu_custom_call.1} parent=1 // pred_check
      _
    $region23: #{tpu_custom_call.1} parent=1 // pred_check_branch
      %64 = sbr.rel (0) target = $region25
    $region24: #{tpu_custom_call.1} parent=1 // pred_region
      _
    $region25: #{tpu_custom_call.1} parent=1 // pred_fallthru
      _
    %65 = vsyncpa [#allocation3], 1
    %66 = vsyncpa [#allocation4], 1

</llo_original>
